<compile_context>
chip_gen: v7x
topology: tpu7x:2x2x1
jax: 0.10.0
libtpu: 0.0.40
codegen_flags: <defaults>
</compile_context>

<pallas_src>
import jax
import jax.numpy as jnp
from jax.experimental import pallas as pl
from jax.experimental.pallas import tpu as pltpu


# ----------------------------- Pallas kernel ------------------------------ #
def pairing_att_kernel(hidden_ref, comp_emb_ref, scores_ref,
                       wq_t_ref, wk_t_ref, wa_ref,
                       attn_w_ref, attn_s_ref, applied_ref):
    h = hidden_ref[...]            # (B, H)   decoder hidden states (whole batch)
    ce = comp_emb_ref[...]         # (B, K, E) complementary-ingredient embeddings
    sc = scores_ref[...]           # (B, K)   pairing scores
    wq_t = wq_t_ref[...]           # (H, H)   query_layer.weight^T
    wk_t = wk_t_ref[...]           # (E, H)   key_layer.weight^T
    wa = wa_ref[...]               # (1, H)   attn.weight (row vector)

    B, K, E = ce.shape
    H = h.shape[1]

    # Fused-batch MXU matmuls: query = hidden @ Wq^T ; key = comp_emb @ Wk^T
    query = jnp.dot(h, wq_t, preferred_element_type=jnp.float32)           # (B, H)
    key = jnp.dot(ce.reshape(B * K, E), wk_t,
                  preferred_element_type=jnp.float32).reshape(B, K, H)     # (B, K, H)

    # scores_att = attn(tanh(query + key)); contract H (lane axis) so the
    # logits come out as (B, K) with K lane-major.
    t = jnp.tanh(key + query[:, None, :])                                  # (B, K, H)
    e = jnp.sum(t * wa[0][None, None, :], axis=-1)                         # (B, K)

    # attn_weights = softmax over K (cross-lane reductions)
    m = jnp.max(e, axis=-1, keepdims=True)                                 # (B, 1)
    p = jnp.exp(e - m)                                                     # (B, K)
    w = p / jnp.sum(p, axis=-1, keepdims=True)                             # (B, K)

    # attn_scores = F.normalize(attn_weights * scores, p=1, dim=-1)
    v = w * sc                                                             # (B, K)
    s = v / jnp.maximum(jnp.sum(jnp.abs(v), axis=-1, keepdims=True), 1e-12)

    # attn_applied = attn_scores @ comp_emb  -> batched (1,K)@(K,E) on the MXU
    applied = jnp.einsum("bqk,bke->bqe", s[:, None, :], ce,
                         preferred_element_type=jnp.float32)[:, 0, :]      # (B, E)

    attn_w_ref[...] = w.astype(attn_w_ref.dtype)
    attn_s_ref[...] = s.astype(attn_s_ref.dtype)
    applied_ref[...] = applied.astype(applied_ref.dtype)


# ------------------------------ JAX wrapper -------------------------------- #
def pairing_att_forward(embedded, hidden, scores, comp_ingr_id, emb_table, params):
    """
    embedded:     (1, B, W)        word-embedded previous token
    hidden:       (1, B, H)        decoder hidden state
    scores:       (B, K)           pairing scores (already looked up)
    comp_ingr_id: (B, K) int32     complementary ingredient ids
    emb_table:    (V, E)           encoder_embedding.weight
    params:       dict with 'wq' (H,H), 'wk' (H,E), 'wa' (1,H)
    Returns (output (1,B,W+E), attn_scores (B,K), attn_weights (B,K),
             has_pairing ()  -- device-side bool, True iff scores.sum() != 0)
    """
    B = embedded.shape[1]
    H = hidden.shape[2]
    K = scores.shape[1]

    # encoder_embedding(comp_ingr_id) — gather glue in plain JAX
    comp_emb = emb_table[comp_ingr_id].astype(jnp.float32)    # (B, K, E)
    E = comp_emb.shape[2]

    hidden_in = hidden[0]                                     # (B, H)
    scores_in = scores.astype(jnp.float32)                    # (B, K)

    wq_t = params["wq"].T                                     # (H, H)
    wk_t = params["wk"].T                                     # (E, H)
    wa = params["wa"]                                         # (1, H)

    out_shape = (
        jax.ShapeDtypeStruct((B, K), jnp.float32),            # attn_weights
        jax.ShapeDtypeStruct((B, K), jnp.float32),            # attn_scores
        jax.ShapeDtypeStruct((B, E), jnp.float32),            # attn_applied
    )

    attn_weights, attn_scores, attn_applied = pl.pallas_call(
        pairing_att_kernel,
        out_shape=out_shape,
        grid_spec=pltpu.PrefetchScalarGridSpec(
            num_scalar_prefetch=0,
            grid=(1,),                                         # whole batch in one step
            in_specs=[
                pl.BlockSpec((B, H), lambda i: (0, 0)),        # hidden
                pl.BlockSpec((B, K, E), lambda i: (0, 0, 0)),  # comp_emb
                pl.BlockSpec((B, K), lambda i: (0, 0)),        # scores
                pl.BlockSpec((H, H), lambda i: (0, 0)),        # Wq^T
                pl.BlockSpec((E, H), lambda i: (0, 0)),        # Wk^T
                pl.BlockSpec((1, H), lambda i: (0, 0)),        # Wa (row)
            ],
            out_specs=(
                pl.BlockSpec((B, K), lambda i: (0, 0)),
                pl.BlockSpec((B, K), lambda i: (0, 0)),
                pl.BlockSpec((B, E), lambda i: (0, 0)),
            ),
        ),
        # Single-step grid: nothing to shard across TensorCores; keep it simple.
        compiler_params=pltpu.CompilerParams(dimension_semantics=("arbitrary",)),
    )(hidden_in, comp_emb, scores_in, wq_t, wk_t, wa)

    # torch.cat((embedded[0], attn_applied[:, 0]), 1).unsqueeze(0)
    output = jnp.concatenate([embedded[0], attn_applied], axis=1)[None]

    # Device-side flag for the torch `scores.sum() == 0` early-return; callers
    # decide what to do with it without forcing a sync inside the hot path.
    has_pairing = jnp.sum(scores_in) != 0.0
    return output, attn_scores, attn_weights, has_pairing


_pairing_att_forward_jit = jax.jit(pairing_att_forward)


def pairing_att_module_forward(embedded, hidden, scores, comp_ingr_id,
                               emb_table, params):
    """Mirrors PairingAtt.forward return semantics (incl. the zero-score branch).

    The kernel path above is fully jitted and sync-free; the host branch here
    exists only to reproduce the torch API that returns `None` when all
    pairing scores are zero (a pytree-shape change that cannot live on device).
    """
    output, attn_scores, attn_weights, has_pairing = _pairing_att_forward_jit(
        embedded, hidden, scores, comp_ingr_id, emb_table, params)
    if not bool(has_pairing):          # host branch, outside the jitted hot path
        return None, attn_weights, comp_ingr_id
    return output, attn_scores, comp_ingr_id


# ------------------------- pure-JAX reference check ------------------------ #
def reference_forward(embedded, hidden, scores, comp_ingr_id, emb_table, params):
    comp_emb = emb_table[comp_ingr_id]                               # (B, K, E)
    query = hidden[0] @ params["wq"].T                               # (B, H)
    key = jnp.einsum("bke,he->bkh", comp_emb, params["wk"])          # (B, K, H)
    e = jnp.einsum("bkh,oh->bko", jnp.tanh(query[:, None, :] + key),
                   params["wa"])[..., 0]                             # (B, K)
    attn_weights = jax.nn.softmax(e, axis=-1)
    v = attn_weights * scores
    attn_scores = v / jnp.maximum(
        jnp.sum(jnp.abs(v), axis=-1, keepdims=True), 1e-12)
    applied = jnp.einsum("bk,bke->be", attn_scores, comp_emb)
    output = jnp.concatenate([embedded[0], applied], axis=1)[None]
    return output, attn_scores, attn_weights


# ---------------------------------- main ----------------------------------- #
if __name__ == "__main__":
    B, H, E, K, W, V = 2, 32, 32, 8, 16, 20   # batch, hidden, ingr_embed, top_k, word_embed, vocab
    UNK_TOKEN = 3
    UNK_TEMP = 0.5

    key0 = jax.random.PRNGKey(0)
    k_emb, k_hid, k_tab, k_wq, k_wk, k_wa, k_sc, k_un = jax.random.split(key0, 8)

    embedded = jax.random.normal(k_emb, (1, B, W), dtype=jnp.float32)
    hidden = jax.random.normal(k_hid, (1, B, H), dtype=jnp.float32)
    emb_table = jax.random.normal(k_tab, (V, E), dtype=jnp.float32) * 0.1

    # Deterministic parameter init (nn.Linear weights, bias=False).
    params = {
        "wq": jax.random.normal(k_wq, (H, H), dtype=jnp.float32) * 0.1,   # query_layer
        "wk": jax.random.normal(k_wk, (H, E), dtype=jnp.float32) * 0.1,   # key_layer
        "wa": jax.random.normal(k_wa, (1, H), dtype=jnp.float32) * 0.1,   # attn
    }

    # TODO(synk): self.pairings.bestPairingsFromIngr (pickled co-occurrence table
    # lookup) has no Pallas equivalent; its results (comp_ingr_id, scores incl.
    # the unk_temp term and unk_token padding) are synthesized deterministically.
    comp_ingr_id = jnp.array(
        [[5, 7, 2, 9, 11, 4, 6, 8],
         [1, 12, 3, 10, 15, UNK_TOKEN, UNK_TOKEN, UNK_TOKEN]], dtype=jnp.int32)
    base_scores = jax.random.uniform(k_sc, (B, K), dtype=jnp.float32)
    unknown = (jax.random.uniform(k_un, (B, K)) > 0.5).astype(jnp.float32)
    valid = jnp.array([[1] * 8, [1] * 5 + [0] * 3], dtype=jnp.float32)
    scores = (base_scores + unknown * UNK_TEMP) * valid

    out, attn_scores, attn_weights, has_pairing = _pairing_att_forward_jit(
        embedded, hidden, scores, comp_ingr_id, emb_table, params)
    jax.block_until_ready((out, attn_scores, attn_weights, has_pairing))

    # Torch-semantics wrapper (host branch only here, mirroring the original API).
    mod_out, mod_scores, mod_ids = pairing_att_module_forward(
        embedded, hidden, scores, comp_ingr_id, emb_table, params)

    ref_out, ref_scores, ref_weights = reference_forward(
        embedded, hidden, scores, comp_ingr_id, emb_table, params)

    assert out.shape == (1, B, W + E)
    assert attn_scores.shape == (B, K)
    assert attn_weights.shape == (B, K)
    assert jnp.allclose(out, ref_out, atol=1e-5, rtol=1e-5)
    assert jnp.allclose(attn_scores, ref_scores, atol=1e-5, rtol=1e-5)
    assert jnp.allclose(attn_weights, ref_weights, atol=1e-5, rtol=1e-5)
    assert mod_out is not None
    assert jnp.allclose(mod_out, ref_out, atol=1e-5, rtol=1e-5)
    assert jnp.allclose(mod_scores, ref_scores, atol=1e-5, rtol=1e-5)

    print("KERNEL_OK")
</pallas_src>

<mosaic_0001>
module attributes {stable_mosaic.version = 11 : i64} {
  func.func @pairing_att_kernel(%arg0: i32, %arg1: memref<2x32xf32, #tpu.memory_space<vmem>>, %arg2: memref<2x8x32xf32, #tpu.memory_space<vmem>>, %arg3: memref<2x8xf32, #tpu.memory_space<vmem>>, %arg4: memref<32x32xf32, #tpu.memory_space<vmem>>, %arg5: memref<32x32xf32, #tpu.memory_space<vmem>>, %arg6: memref<1x32xf32, #tpu.memory_space<vmem>>, %arg7: memref<2x8xf32, #tpu.memory_space<vmem>>, %arg8: memref<2x8xf32, #tpu.memory_space<vmem>>, %arg9: memref<2x32xf32, #tpu.memory_space<vmem>>) attributes {dimension_semantics = [#tpu.dimension_semantics<arbitrary>], iteration_bounds = array<i64: 1>, scalar_prefetch = 0 : i64, scratch_operands = 0 : i64, tpu.core_type = #tpu.core_type<tc>, window_params = [{pipeline_mode = #tpu.pipeline_mode<synchronous>, transform_indices = @transform_0, window_bounds = array<i64: 2, 32>}, {pipeline_mode = #tpu.pipeline_mode<synchronous>, transform_indices = @transform_1, window_bounds = array<i64: 2, 8, 32>}, {pipeline_mode = #tpu.pipeline_mode<synchronous>, transform_indices = @transform_2, window_bounds = array<i64: 2, 8>}, {pipeline_mode = #tpu.pipeline_mode<synchronous>, transform_indices = @transform_3, window_bounds = array<i64: 32, 32>}, {pipeline_mode = #tpu.pipeline_mode<synchronous>, transform_indices = @transform_4, window_bounds = array<i64: 32, 32>}, {pipeline_mode = #tpu.pipeline_mode<synchronous>, transform_indices = @transform_5, window_bounds = array<i64: 1, 32>}, {pipeline_mode = #tpu.pipeline_mode<synchronous>, transform_indices = @transform_6, window_bounds = array<i64: 2, 8>}, {pipeline_mode = #tpu.pipeline_mode<synchronous>, transform_indices = @transform_7, window_bounds = array<i64: 2, 8>}, {pipeline_mode = #tpu.pipeline_mode<synchronous>, transform_indices = @transform_8, window_bounds = array<i64: 2, 32>}]} {
    %c0 = arith.constant 0 : index
    %c0_0 = arith.constant 0 : index
    %0 = vector.load %arg1[%c0, %c0_0] : memref<2x32xf32, #tpu.memory_space<vmem>>, vector<2x32xf32>
    %c0_1 = arith.constant 0 : index
    %c0_2 = arith.constant 0 : index
    %c0_3 = arith.constant 0 : index
    %1 = vector.load %arg2[%c0_1, %c0_2, %c0_3] : memref<2x8x32xf32, #tpu.memory_space<vmem>>, vector<2x8x32xf32>
    %c0_4 = arith.constant 0 : index
    %c0_5 = arith.constant 0 : index
    %2 = vector.load %arg3[%c0_4, %c0_5] : memref<2x8xf32, #tpu.memory_space<vmem>>, vector<2x8xf32>
    %c0_6 = arith.constant 0 : index
    %c0_7 = arith.constant 0 : index
    %3 = vector.load %arg4[%c0_6, %c0_7] : memref<32x32xf32, #tpu.memory_space<vmem>>, vector<32x32xf32>
    %c0_8 = arith.constant 0 : index
    %c0_9 = arith.constant 0 : index
    %4 = vector.load %arg5[%c0_8, %c0_9] : memref<32x32xf32, #tpu.memory_space<vmem>>, vector<32x32xf32>
    %c0_10 = arith.constant 0 : index
    %c0_11 = arith.constant 0 : index
    %5 = vector.load %arg6[%c0_10, %c0_11] : memref<1x32xf32, #tpu.memory_space<vmem>>, vector<1x32xf32>
    %cst = arith.constant dense<0.000000e+00> : vector<2x32xf32>
    %6 = tpu.matmul %0, %3, %cst {dimension_numbers = #tpu.dot_dimension_numbers<[1], [0], [0], [1], [0, 0, 1, 1], [], []>} : vector<2x32xf32>, vector<32x32xf32>, vector<2x32xf32> -> vector<2x32xf32>
    %7 = vector.shape_cast %1 : vector<2x8x32xf32> to vector<16x32xf32>
    %cst_12 = arith.constant dense<0.000000e+00> : vector<16x32xf32>
    %8 = tpu.matmul %7, %4, %cst_12 {dimension_numbers = #tpu.dot_dimension_numbers<[1], [0], [0], [1], [0, 0, 1, 1], [], []>} : vector<16x32xf32>, vector<32x32xf32>, vector<16x32xf32> -> vector<16x32xf32>
    %9 = vector.shape_cast %8 : vector<16x32xf32> to vector<2x8x32xf32>
    %10 = vector.shape_cast %6 : vector<2x32xf32> to vector<2x1x32xf32>
    %11 = vector.broadcast %10 : vector<2x1x32xf32> to vector<2x8x32xf32>
    %12 = arith.addf %9, %11 : vector<2x8x32xf32>
    %13 = math.tanh %12 : vector<2x8x32xf32>
    %14 = vector.shape_cast %5 : vector<1x32xf32> to vector<32xf32>
    %15 = vector.shape_cast %14 : vector<32xf32> to vector<1x1x32xf32>
    %16 = vector.broadcast %15 : vector<1x1x32xf32> to vector<2x8x32xf32>
    %17 = arith.mulf %13, %16 : vector<2x8x32xf32>
    %cst_13 = arith.constant dense<0.000000e+00> : vector<2x8xf32>
    %18 = vector.multi_reduction <add>, %17, %cst_13 [2] : vector<2x8x32xf32> to vector<2x8xf32>
    %cst_14 = arith.constant dense<0xFF800000> : vector<2xf32>
    %19 = vector.multi_reduction <maximumf>, %18, %cst_14 [1] : vector<2x8xf32> to vector<2xf32>
    %20 = vector.shape_cast %19 : vector<2xf32> to vector<2x1xf32>
    %21 = vector.broadcast %20 : vector<2x1xf32> to vector<2x8xf32>
    %22 = arith.subf %18, %21 : vector<2x8xf32>
    %23 = math.exp %22 : vector<2x8xf32>
    %cst_15 = arith.constant dense<0.000000e+00> : vector<2xf32>
    %24 = vector.multi_reduction <add>, %23, %cst_15 [1] : vector<2x8xf32> to vector<2xf32>
    %25 = vector.shape_cast %24 : vector<2xf32> to vector<2x1xf32>
    %26 = vector.broadcast %25 : vector<2x1xf32> to vector<2x8xf32>
    %27 = arith.divf %23, %26 : vector<2x8xf32>
    %28 = arith.mulf %27, %2 : vector<2x8xf32>
    %29 = math.absf %28 : vector<2x8xf32>
    %cst_16 = arith.constant dense<0.000000e+00> : vector<2xf32>
    %30 = vector.multi_reduction <add>, %29, %cst_16 [1] : vector<2x8xf32> to vector<2xf32>
    %31 = vector.shape_cast %30 : vector<2xf32> to vector<2x1xf32>
    %cst_17 = arith.constant 9.99999996E-13 : f32
    %32 = vector.broadcast %cst_17 : f32 to vector<2x1xf32>
    %33 = arith.maximumf %31, %32 : vector<2x1xf32>
    %34 = vector.broadcast %33 : vector<2x1xf32> to vector<2x8xf32>
    %35 = arith.divf %28, %34 : vector<2x8xf32>
    %36 = vector.shape_cast %35 : vector<2x8xf32> to vector<2x1x8xf32>
    "tpu.trace_start"() <{level = 10 : i32, message = "bqk,bke->bqe"}> : () -> ()
    %cst_18 = arith.constant dense<0.000000e+00> : vector<2x1x32xf32>
    %37 = tpu.matmul %36, %1, %cst_18 {dimension_numbers = #tpu.dot_dimension_numbers<[2], [1], [1], [2], [0, 0, 0, 1, 1, 2], [0], [0]>} : vector<2x1x8xf32>, vector<2x8x32xf32>, vector<2x1x32xf32> -> vector<2x1x32xf32>
    "tpu.trace_stop"() : () -> ()
    %38 = vector.shape_cast %37 : vector<2x1x32xf32> to vector<2x32xf32>
    %c0_19 = arith.constant 0 : index
    %c0_20 = arith.constant 0 : index
    %39 = vector.load %arg7[%c0_19, %c0_20] : memref<2x8xf32, #tpu.memory_space<vmem>>, vector<2x8xf32>
    tpu.vector_store %arg7[%c0_19, %c0_20], %27 {strides = array<i32>} : memref<2x8xf32, #tpu.memory_space<vmem>>, vector<2x8xf32>,
    %c0_21 = arith.constant 0 : index
    %c0_22 = arith.constant 0 : index
    %40 = vector.load %arg8[%c0_21, %c0_22] : memref<2x8xf32, #tpu.memory_space<vmem>>, vector<2x8xf32>
    tpu.vector_store %arg8[%c0_21, %c0_22], %35 {strides = array<i32>} : memref<2x8xf32, #tpu.memory_space<vmem>>, vector<2x8xf32>,
    %c0_23 = arith.constant 0 : index
    %c0_24 = arith.constant 0 : index
    %41 = vector.load %arg9[%c0_23, %c0_24] : memref<2x32xf32, #tpu.memory_space<vmem>>, vector<2x32xf32>
    tpu.vector_store %arg9[%c0_23, %c0_24], %38 {strides = array<i32>} : memref<2x32xf32, #tpu.memory_space<vmem>>, vector<2x32xf32>,
    return
  }
  func.func @transform_0(%arg0: i32) -> (i32, i32) {
    %c0_i32 = arith.constant 0 : i32
    %c0_i32_0 = arith.constant 0 : i32
    %c0_i32_1 = arith.constant 0 : i32
    return %c0_i32, %c0_i32_0 : i32, i32
  }
  func.func @transform_1(%arg0: i32) -> (i32, i32, i32) {
    %c0_i32 = arith.constant 0 : i32
    %c0_i32_0 = arith.constant 0 : i32
    %c0_i32_1 = arith.constant 0 : i32
    %c0_i32_2 = arith.constant 0 : i32
    return %c0_i32, %c0_i32_0, %c0_i32_1 : i32, i32, i32
  }
  func.func @transform_2(%arg0: i32) -> (i32, i32) {
    %c0_i32 = arith.constant 0 : i32
    %c0_i32_0 = arith.constant 0 : i32
    %c0_i32_1 = arith.constant 0 : i32
    return %c0_i32, %c0_i32_0 : i32, i32
  }
  func.func @transform_3(%arg0: i32) -> (i32, i32) {
    %c0_i32 = arith.constant 0 : i32
    %c0_i32_0 = arith.constant 0 : i32
    %c0_i32_1 = arith.constant 0 : i32
    return %c0_i32, %c0_i32_0 : i32, i32
  }
  func.func @transform_4(%arg0: i32) -> (i32, i32) {
    %c0_i32 = arith.constant 0 : i32
    %c0_i32_0 = arith.constant 0 : i32
    %c0_i32_1 = arith.constant 0 : i32
    return %c0_i32, %c0_i32_0 : i32, i32
  }
  func.func @transform_5(%arg0: i32) -> (i32, i32) {
    %c0_i32 = arith.constant 0 : i32
    %c0_i32_0 = arith.constant 0 : i32
    %c0_i32_1 = arith.constant 0 : i32
    return %c0_i32, %c0_i32_0 : i32, i32
  }
  func.func @transform_6(%arg0: i32) -> (i32, i32) {
    %c0_i32 = arith.constant 0 : i32
    %c0_i32_0 = arith.constant 0 : i32
    %c0_i32_1 = arith.constant 0 : i32
    return %c0_i32, %c0_i32_0 : i32, i32
  }
  func.func @transform_7(%arg0: i32) -> (i32, i32) {
    %c0_i32 = arith.constant 0 : i32
    %c0_i32_0 = arith.constant 0 : i32
    %c0_i32_1 = arith.constant 0 : i32
    return %c0_i32, %c0_i32_0 : i32, i32
  }
  func.func @transform_8(%arg0: i32) -> (i32, i32) {
    %c0_i32 = arith.constant 0 : i32
    %c0_i32_0 = arith.constant 0 : i32
    %c0_i32_1 = arith.constant 0 : i32
    return %c0_i32, %c0_i32_0 : i32, i32
  }
}

</mosaic_0001>

<llo_original>
// kernel: pairing_att_forward.1
$region0: #{pairing_att_forward.1}
  #allocation0 [shape = 'u32[]', space=smem, size = 0x4, offset = 0x4, fixed_abs, tag = 'smem constant byte address 0x4 - core index']
  #allocation1 [shape = 'u32[144,128]{1,0:T(1,128)}', space=vmem, size = 0x12000, scoped, tag = 'internal scratch']
  %s0 = inlined_call_operand.vmem [shape: f32[2,32], index: 0, kind: input, shape index: {}]
  %s1 = inlined_call_operand.vmem [shape: f32[2,8,32], index: 1, kind: input, shape index: {}]
  %s2 = inlined_call_operand.vmem [shape: f32[2,8], index: 2, kind: input, shape index: {}]
  %s3 = inlined_call_operand.vmem [shape: f32[32,32], index: 3, kind: input, shape index: {}]
  %s4 = inlined_call_operand.vmem [shape: f32[32,32], index: 4, kind: input, shape index: {}]
  %s5 = inlined_call_operand.vmem [shape: f32[1,32], index: 5, kind: input, shape index: {}]
  %s6 = inlined_call_operand.hbm [shape: f32[2,8], index: 6, kind: output, shape index: {0}]
  %s7 = inlined_call_operand.hbm [shape: f32[2,8], index: 7, kind: output, shape index: {1}]
  %s8 = inlined_call_operand.vmem [shape: f32[2,32], index: 8, kind: output, shape index: {2}]
  %9 = xla_tuple %s6, %s7, %s8
  %s10 = sld [smem:[#allocation0]]
  $region50: #{pairing_att_forward.1} parent=0
    _
  %s12 = ssub.s32 1, %s10
  %s13 = scalar_select 0, %s12, %s10
  $region1: #{pairing_att_forward.1} parent=0
    #allocation2 [shape = 'u8[1024]{0}', space=vmem, size = 0x400, scoped, tag = 'output window, operand 0, single buffered']
    #allocation3 [shape = 's32[1]{0}', space=sflag, size = 0x4, scoped, tag = 'scoped memory for pairing_att_forward.1']
    #allocation4 [shape = 'u8[1024]{0}', space=vmem, size = 0x400, scoped, tag = 'output window, operand 1, single buffered']
    #allocation5 [shape = 's32[1]{0}', space=sflag, size = 0x4, scoped, tag = 'scoped memory for pairing_att_forward.1']
    %14 = vsyncpa [#allocation3], 0
    %15 = vsyncpa [#allocation5], 0
    // Predicated region
    $region2: #{pairing_att_forward.1} parent=1 // pred_check
      _
    $region3: #{pairing_att_forward.1} parent=1 // pred_check_branch
      %17 = sbr.rel (0) target = $region5
    $region4: #{pairing_att_forward.1} parent=1 // pred_region
      _
    $region5: #{pairing_att_forward.1} parent=1 // pred_fallthru
      _
    // Predicated region
    $region6: #{pairing_att_forward.1} parent=1 // pred_check
      _
    $region7: #{pairing_att_forward.1} parent=1 // pred_check_branch
      %19 = sbr.rel (0) target = $region9
    $region8: #{pairing_att_forward.1} parent=1 // pred_region
      _
    $region9: #{pairing_att_forward.1} parent=1 // pred_fallthru
      _
    // Predicated region
    $region10: #{pairing_att_forward.1} parent=1 // pred_check
      _
    $region11: #{pairing_att_forward.1} parent=1 // pred_check_branch
      %21 = sbr.rel (0) target = $region13
    $region12: #{pairing_att_forward.1} parent=1 // pred_region
      _
    $region13: #{pairing_att_forward.1} parent=1 // pred_fallthru
      _
    // Predicated region
    $region14: #{pairing_att_forward.1} parent=1 // pred_check
      _
    $region15: #{pairing_att_forward.1} parent=1 // pred_check_branch
      %23 = sbr.rel (0) target = $region17
    $region16: #{pairing_att_forward.1} parent=1 // pred_region
      _
    $region17: #{pairing_att_forward.1} parent=1 // pred_fallthru
      _
    // Predicated region
    $region18: #{pairing_att_forward.1} parent=1 // pred_check
      _
    $region19: #{pairing_att_forward.1} parent=1 // pred_check_branch
      %25 = sbr.rel (0) target = $region21
    $region20: #{pairing_att_forward.1} parent=1 // pred_region
      _
    $region21: #{pairing_att_forward.1} parent=1 // pred_fallthru
      _
    // Predicated region
    $region22: #{pairing_att_forward.1} parent=1 // pred_check
      _
    $region23: #{pairing_att_forward.1} parent=1 // pred_check_branch
      %27 = sbr.rel (0) target = $region25
    $region24: #{pairing_att_forward.1} parent=1 // pred_region
      _
    $region25: #{pairing_att_forward.1} parent=1 // pred_fallthru
      _
    %v28 = vld [vmem:[%s0] sm:$0x3]
    %v29 = vld [vmem:[%s1] sm:$0xff]
    %v30 = vld [vmem:[%s1 + $0x8] sm:$0xff]
    %v31 = vld [vmem:[%s2] sm:$0x3]
    %v32 = vld [vmem:[%s3] sm:$0xff]
    %v33 = vld [vmem:[%s3 + $0x8] sm:$0xff]
    %v34 = vld [vmem:[%s3 + $0x10] sm:$0xff]
    %v35 = vld [vmem:[%s3 + $0x18] sm:$0xff]
    %v36 = vld [vmem:[%s4] sm:$0xff]
    %v37 = vld [vmem:[%s4 + $0x8] sm:$0xff]
    %v38 = vld [vmem:[%s4 + $0x10] sm:$0xff]
    %v39 = vld [vmem:[%s4 + $0x18] sm:$0xff]
    %v40 = vld [vmem:[%s5] sm:$0x1]
    %vm41 = vcmask 261120
    %v43 = vsel %vm41, %v28, 0
    %45 = vmatprep.subr.mxu0 0.0
    %46 = vmatpush1.msra.mxu0 %v32
    %47 = vmatprep.subr.mxu0 0.0
    %48 = vmatpush1.msra.mxu0 %v33
    %49 = vmatprep.subr.mxu0 0.0
    %50 = vmatpush1.msra.mxu0 %v34
    %51 = vmatprep.subr.mxu0 0.0
    %52 = vmatpush1.msra.mxu0 %v35
    %53 = vmatprep.subr.mxu0 0.0
    %54 = vmatpush1.msra.mxu0 0.0
    %55 = vmatprep.subr.mxu0 0.0
    %56 = vmatpush1.msra.mxu0 0.0
    %57 = vmatprep.subr.mxu0 0.0
    %58 = vmatpush1.msra.mxu0 0.0
    %59 = vmatprep.subr.mxu0 0.0
    %60 = vmatpush1.msra.mxu0 0.0
    %61 = vmatprep.subr.mxu0 0.0
    %62 = vmatpush1.msra.mxu0 0.0
    %63 = vmatprep.subr.mxu0 0.0
    %64 = vmatpush1.msra.mxu0 0.0
    %65 = vmatprep.subr.mxu0 0.0
    %66 = vmatpush1.msra.mxu0 0.0
    %67 = vmatprep.subr.mxu0 0.0
    %68 = vmatpush1.msra.mxu0 0.0
    %69 = vmatprep.subr.mxu0 0.0
    %70 = vmatpush1.msra.mxu0 0.0
    %71 = vmatprep.subr.mxu0 0.0
    %72 = vmatpush1.msra.mxu0 0.0
    %73 = vmatprep.subr.mxu0 0.0
    %74 = vmatpush1.msra.mxu0 0.0
    %75 = vmatprep.subr.mxu0 0.0
    %76 = vmatpush1.msra.mxu0 0.0
    %77 = vmatprep.subr.mxu0 0.0
    %78 = vmatpush1.msra.mxu0 0.0
    %79 = vmatprep.subr.mxu0 0.0
    %80 = vmatpush1.msra.mxu0 0.0
    %81 = vmatprep.subr.mxu0 0.0
    %82 = vmatpush1.msra.mxu0 0.0
    %83 = vmatprep.subr.mxu0 0.0
    %84 = vmatpush1.msra.mxu0 0.0
    %85 = vmatprep.subr.mxu0 0.0
    %86 = vmatpush1.msra.mxu0 0.0
    %87 = vmatprep.subr.mxu0 0.0
    %88 = vmatpush1.msra.mxu0 0.0
    %89 = vmatprep.subr.mxu0 0.0
    %90 = vmatpush1.msra.mxu0 0.0
    %91 = vmatprep.subr.mxu0 0.0
    %92 = vmatpush1.msra.mxu0 0.0
    %93 = vmatprep.subr.mxu0 0.0
    %94 = vmatpush1.msra.mxu0 0.0
    %95 = vmatprep.subr.mxu0 0.0
    %96 = vmatpush1.msra.mxu0 0.0
    %97 = vmatprep.subr.mxu0 0.0
    %98 = vmatpush1.msra.mxu0 0.0
    %99 = vmatprep.subr.mxu0 0.0
    %100 = vmatpush1.msra.mxu0 0.0
    %101 = vmatprep.subr.mxu0 0.0
    %102 = vmatpush1.msra.mxu0 0.0
    %103 = vmatprep.subr.mxu0 0.0
    %104 = vmatpush1.msra.mxu0 0.0
    %105 = vmatprep.subr.mxu0 0.0
    %106 = vmatpush1.msra.mxu0 0.0
    %107 = vmatprep.subr.mxu0 0.0
    %108 = vmatpush1.msra.mxu0 0.0
    %109 = vmatprep.mubr.f32.mxu0 0.0
    %110 = vmatmul.mubr.f32.gmra.mrb[0].mxu0 %v43
    %v111 = vpop.f32.mrb[0].mxu0
    %v112 = vadd.f32 0.0, %v111
    %v113 = vpop.f32.mrb[0].mxu0
    %114 = vdwg.mxu0
    %v116 = vsel %vm41, %v29, 0
    %v119 = vsel %vm41, %v30, 0
    %121 = vmatprep.subr.mxu0 0.0
    %122 = vmatpush1.msra.mxu0 %v36
    %123 = vmatprep.subr.mxu0 0.0
    %124 = vmatpush1.msra.mxu0 %v37
    %125 = vmatprep.subr.mxu0 0.0
    %126 = vmatpush1.msra.mxu0 %v38
    %127 = vmatprep.subr.mxu0 0.0
    %128 = vmatpush1.msra.mxu0 %v39
    %129 = vmatprep.subr.mxu0 0.0
    %130 = vmatpush1.msra.mxu0 0.0
    %131 = vmatprep.subr.mxu0 0.0
    %132 = vmatpush1.msra.mxu0 0.0
    %133 = vmatprep.subr.mxu0 0.0
    %134 = vmatpush1.msra.mxu0 0.0
    %135 = vmatprep.subr.mxu0 0.0
    %136 = vmatpush1.msra.mxu0 0.0
    %137 = vmatprep.subr.mxu0 0.0
    %138 = vmatpush1.msra.mxu0 0.0
    %139 = vmatprep.subr.mxu0 0.0
    %140 = vmatpush1.msra.mxu0 0.0
    %141 = vmatprep.subr.mxu0 0.0
    %142 = vmatpush1.msra.mxu0 0.0
    %143 = vmatprep.subr.mxu0 0.0
    %144 = vmatpush1.msra.mxu0 0.0
    %145 = vmatprep.subr.mxu0 0.0
    %146 = vmatpush1.msra.mxu0 0.0
    %147 = vmatprep.subr.mxu0 0.0
    %148 = vmatpush1.msra.mxu0 0.0
    %149 = vmatprep.subr.mxu0 0.0
    %150 = vmatpush1.msra.mxu0 0.0
    %151 = vmatprep.subr.mxu0 0.0
    %152 = vmatpush1.msra.mxu0 0.0
    %153 = vmatprep.subr.mxu0 0.0
    %154 = vmatpush1.msra.mxu0 0.0
    %155 = vmatprep.subr.mxu0 0.0
    %156 = vmatpush1.msra.mxu0 0.0
    %157 = vmatprep.subr.mxu0 0.0
    %158 = vmatpush1.msra.mxu0 0.0
    %159 = vmatprep.subr.mxu0 0.0
    %160 = vmatpush1.msra.mxu0 0.0
    %161 = vmatprep.subr.mxu0 0.0
    %162 = vmatpush1.msra.mxu0 0.0
    %163 = vmatprep.subr.mxu0 0.0
    %164 = vmatpush1.msra.mxu0 0.0
    %165 = vmatprep.subr.mxu0 0.0
    %166 = vmatpush1.msra.mxu0 0.0
    %167 = vmatprep.subr.mxu0 0.0
    %168 = vmatpush1.msra.mxu0 0.0
    %169 = vmatprep.subr.mxu0 0.0
    %170 = vmatpush1.msra.mxu0 0.0
    %171 = vmatprep.subr.mxu0 0.0
    %172 = vmatpush1.msra.mxu0 0.0
    %173 = vmatprep.subr.mxu0 0.0
    %174 = vmatpush1.msra.mxu0 0.0
    %175 = vmatprep.subr.mxu0 0.0
    %176 = vmatpush1.msra.mxu0 0.0
    %177 = vmatprep.subr.mxu0 0.0
    %178 = vmatpush1.msra.mxu0 0.0
    %179 = vmatprep.subr.mxu0 0.0
    %180 = vmatpush1.msra.mxu0 0.0
    %181 = vmatprep.subr.mxu0 0.0
    %182 = vmatpush1.msra.mxu0 0.0
    %183 = vmatprep.subr.mxu0 0.0
    %184 = vmatpush1.msra.mxu0 0.0
    %185 = vmatprep.mubr.f32.mxu0 0.0
    %186 = vmatmul.mubr.f32.gmra.mrb[0].mxu0 %v116
    %v187 = vpop.f32.mrb[0].mxu0
    %v188 = vadd.f32 0.0, %v187
    %v189 = vpop.f32.mrb[0].mxu0
    %190 = vmatprep.mubr.f32.mxu0 0.0
    %191 = vmatmul.mubr.f32.gmra.mrb[0].mxu0 %v119
    %v192 = vpop.f32.mrb[0].mxu0
    %v193 = vadd.f32 0.0, %v192
    %v194 = vpop.f32.mrb[0].mxu0
    %195 = vdwg.mxu0
    %v198 = vunpack.c.l.s4 1966171168
    %v199 = vunpack.c.0.s8 %v198
    %v200 = vlaneseq
    %v201 = vshrl.u32 %v200, 7
    %v202 = vsub.s32 %v199, %v201
    %v203 = vrot.slane %v112, %v202
    %v204 = vcombine.high %v203, %v203
    %v206 = vunpack.c.l.s4 1966171168
    %v207 = vunpack.c.0.s8 %v206
    %v208 = vlaneseq
    %v209 = vshrl.u32 %v208, 7
    %v210 = vsub.s32 %v207, %v209
    %v211 = vrot.slane %v203, %v210
    %v213 = vunpack.c.l.s4 1966171168
    %v214 = vunpack.c.0.s8 %v213
    %v215 = vlaneseq
    %v216 = vshrl.u32 %v215, 7
    %v217 = vsub.s32 %v214, %v216
    %v218 = vrot.slane %v204, %v217
    %v219 = vlaneseq
    %v220 = vshrl.u32 %v219, 7
    %v221 = vsub.s32 0, %v220
    %v222 = vrot.slane %v211, %v221
    %v223 = vlaneseq
    %v224 = vshrl.u32 %v223, 7
    %v225 = vsub.s32 0, %v224
    %v226 = vrot.slane %v218, %v225
    %v229 = vadd.f32 %v188, %v222
    %v230 = vadd.f32 %v193, %v226
    %v231 = vtanh.pop %v229
    %v232 = vtanh.pop %v230
    %v234 = vlaneseq
    %v235 = vshrl.u32 %v234, 7
    %v236 = vsub.s32 0, %v235
    %v237 = vrot.slane %v40, %v236
    %v239 = vmul.f32 %v231, %v237
    %v240 = vmul.f32 %v232, %v237
    %v241 = vsel %vm41, %v239, 0.0
    %242 = vadd.xlane.f32.xlu0 %v241
    %v243 = vpop.xlane.xlu0 %242
    %v244 = vsel %vm41, %v240, 0.0
    %245 = vadd.xlane.f32.xlu0 %v244
    %v246 = vpop.xlane.xlu0 %245
    %v249 = vlaneseq
    %v250 = vand.u32 %v249, 127
    %v251 = vlaneseq
    %v252 = vshrl.u32 %v251, 7
    %v253 = vsub.s32 %v250, %v252
    %v254 = vrot.slane %v243, %v253
    %v255 = vlaneseq
    %v256 = vshrl.u32 %v255, 7
    %v257 = vsub.s32 %v250, %v256
    %v258 = vrot.slane %v246, %v257
    %vm259 = vcmask 1041409
    %v260 = vsel %vm259, %v258, %v254
    %vm262 = vcmask 58368
    %v263 = vsel %vm262, %v260, -inf
    %264 = vmax.xlane.f32.xlu0 %v263
    %v265 = vpop.xlane.xlu0 %264
    %v267 = vlaneseq
    %v268 = vshrl.u32 %v267, 7
    %v269 = vsub.s32 0, %v268
    %v270 = vrot.slane %v265, %v269
    %v271 = vlaneseq
    %v272 = vshrl.u32 %v271, 7
    %v273 = vsub.s32 1, %v272
    %v274 = vrot.slane %v265, %v273
    %v277 = vsub.f32 %v243, %v270
    %v278 = vsub.f32 %v246, %v274
    %v279 = vmul.f32 %v277, 1.442695
    %v280 = vpow.pop %v279
    %v281 = vmul.f32 %v278, 1.442695
    %v282 = vpow.pop %v281
    %285 = vset.pattern.permute.xlu0 0
    %286 = vperm.xlu0 %285, %v280
    %v287 = vpop.permute.xlu0 %286
    %288 = vset.pattern.permute.xlu0 0
    %289 = vperm.xlu0 %288, %v282
    %v290 = vpop.permute.xlu0 %289
    %v291 = vlaneseq
    %v292 = vshrl.u32 %v291, 7
    %v293 = vsub.s32 %v250, %v292
    %v294 = vrot.slane %v287, %v293
    %v295 = vlaneseq
    %v296 = vshrl.u32 %v295, 7
    %v297 = vsub.s32 %v250, %v296
    %v298 = vrot.slane %v290, %v297
    %v299 = vsel %vm259, %v298, %v294
    %v301 = vsel %vm262, %v299, 0.0
    %302 = vadd.xlane.f32.xlu0 %v301
    %v303 = vpop.xlane.xlu0 %302
    %v305 = vlaneseq
    %v306 = vshrl.u32 %v305, 7
    %v307 = vsub.s32 0, %v306
    %v308 = vrot.slane %v303, %v307
    %v309 = vlaneseq
    %v310 = vshrl.u32 %v309, 7
    %v311 = vsub.s32 1, %v310
    %v312 = vrot.slane %v303, %v311
    %v315 = vrcp.pop %v308
    %v316 = vmul.f32 %v280, %v315
    %v317 = vrcp.pop %v312
    %v318 = vmul.f32 %v282, %v317
    %v320 = vlaneseq
    %v321 = vshrl.u32 %v320, 7
    %v322 = vsub.s32 0, %v321
    %v323 = vrot.slane %v31, %v322
    %325 = vbcast.lane.b32.xlu0 %v323, 256
    %v326 = vpop.permute.xlu0 %325
    %v327 = vlaneseq
    %v328 = vshrl.u32 %v327, 7
    %v329 = vsub.s32 1, %v328
    %v330 = vrot.slane %v31, %v329
    %332 = vbcast.lane.b32.xlu0 %v330, 256
    %v333 = vpop.permute.xlu0 %332
    %v336 = vmul.f32 %v316, %v326
    %v337 = vmul.f32 %v318, %v333
    %v338 = vand.u32 2147483647, %v336
    %v339 = vand.u32 2147483647, %v337
    %342 = vset.pattern.permute.xlu0 0
    %343 = vperm.xlu0 %342, %v338
    %v344 = vpop.permute.xlu0 %343
    %345 = vset.pattern.permute.xlu0 0
    %346 = vperm.xlu0 %345, %v339
    %v347 = vpop.permute.xlu0 %346
    %v348 = vlaneseq
    %v349 = vshrl.u32 %v348, 7
    %v350 = vsub.s32 %v250, %v349
    %v351 = vrot.slane %v344, %v350
    %v352 = vlaneseq
    %v353 = vshrl.u32 %v352, 7
    %v354 = vsub.s32 %v250, %v353
    %v355 = vrot.slane %v347, %v354
    %v356 = vsel %vm259, %v355, %v351
    %v358 = vsel %vm262, %v356, 0.0
    %359 = vadd.xlane.f32.xlu0 %v358
    %v360 = vpop.xlane.xlu0 %359
    %v361 = vmax.f32 %v360, 1e-12
    %v363 = vlaneseq
    %v364 = vshrl.u32 %v363, 7
    %v365 = vsub.s32 0, %v364
    %v366 = vrot.slane %v361, %v365
    %v367 = vlaneseq
    %v368 = vshrl.u32 %v367, 7
    %v369 = vsub.s32 1, %v368
    %v370 = vrot.slane %v361, %v369
    %v373 = vrcp.pop %v366
    %v374 = vmul.f32 %v336, %v373
    %v375 = vrcp.pop %v370
    %v376 = vmul.f32 %v337, %v375
    %378 = vset.pattern.permute.xlu0 0
    %379 = vperm.xlu0 %378, %v374
    %v380 = vpop.permute.xlu0 %379
    %v381 = vlaneseq
    %v382 = vshrl.u32 %v381, 7
    %v383 = vsub.s32 %v250, %v382
    %v384 = vrot.slane %v380, %v383
    %vm385 = vcmask 64512
    %v386 = vsel %vm385, %v384, 0
    %388 = vmatprep.subr.mxu0 0.0
    %389 = vmatpush1.msra.mxu0 %v29
    %390 = vmatprep.subr.mxu0 0.0
    %391 = vmatpush1.msra.mxu0 0.0
    %392 = vmatprep.subr.mxu0 0.0
    %393 = vmatpush1.msra.mxu0 0.0
    %394 = vmatprep.subr.mxu0 0.0
    %395 = vmatpush1.msra.mxu0 0.0
    %396 = vmatprep.subr.mxu0 0.0
    %397 = vmatpush1.msra.mxu0 0.0
    %398 = vmatprep.subr.mxu0 0.0
    %399 = vmatpush1.msra.mxu0 0.0
    %400 = vmatprep.subr.mxu0 0.0
    %401 = vmatpush1.msra.mxu0 0.0
    %402 = vmatprep.subr.mxu0 0.0
    %403 = vmatpush1.msra.mxu0 0.0
    %404 = vmatprep.subr.mxu0 0.0
    %405 = vmatpush1.msra.mxu0 0.0
    %406 = vmatprep.subr.mxu0 0.0
    %407 = vmatpush1.msra.mxu0 0.0
    %408 = vmatprep.subr.mxu0 0.0
    %409 = vmatpush1.msra.mxu0 0.0
    %410 = vmatprep.subr.mxu0 0.0
    %411 = vmatpush1.msra.mxu0 0.0
    %412 = vmatprep.subr.mxu0 0.0
    %413 = vmatpush1.msra.mxu0 0.0
    %414 = vmatprep.subr.mxu0 0.0
    %415 = vmatpush1.msra.mxu0 0.0
    %416 = vmatprep.subr.mxu0 0.0
    %417 = vmatpush1.msra.mxu0 0.0
    %418 = vmatprep.subr.mxu0 0.0
    %419 = vmatpush1.msra.mxu0 0.0
    %420 = vmatprep.subr.mxu0 0.0
    %421 = vmatpush1.msra.mxu0 0.0
    %422 = vmatprep.subr.mxu0 0.0
    %423 = vmatpush1.msra.mxu0 0.0
    %424 = vmatprep.subr.mxu0 0.0
    %425 = vmatpush1.msra.mxu0 0.0
    %426 = vmatprep.subr.mxu0 0.0
    %427 = vmatpush1.msra.mxu0 0.0
    %428 = vmatprep.subr.mxu0 0.0
    %429 = vmatpush1.msra.mxu0 0.0
    %430 = vmatprep.subr.mxu0 0.0
    %431 = vmatpush1.msra.mxu0 0.0
    %432 = vmatprep.subr.mxu0 0.0
    %433 = vmatpush1.msra.mxu0 0.0
    %434 = vmatprep.subr.mxu0 0.0
    %435 = vmatpush1.msra.mxu0 0.0
    %436 = vmatprep.subr.mxu0 0.0
    %437 = vmatpush1.msra.mxu0 0.0
    %438 = vmatprep.subr.mxu0 0.0
    %439 = vmatpush1.msra.mxu0 0.0
    %440 = vmatprep.subr.mxu0 0.0
    %441 = vmatpush1.msra.mxu0 0.0
    %442 = vmatprep.subr.mxu0 0.0
    %443 = vmatpush1.msra.mxu0 0.0
    %444 = vmatprep.subr.mxu0 0.0
    %445 = vmatpush1.msra.mxu0 0.0
    %446 = vmatprep.subr.mxu0 0.0
    %447 = vmatpush1.msra.mxu0 0.0
    %448 = vmatprep.subr.mxu0 0.0
    %449 = vmatpush1.msra.mxu0 0.0
    %450 = vmatprep.subr.mxu0 0.0
    %451 = vmatpush1.msra.mxu0 0.0
    %452 = vmatprep.mubr.f32.mxu0 0.0
    %453 = vmatmul.mubr.f32.gmra.mrb[0].mxu0 %v386
    %v454 = vpop.f32.mrb[0].mxu0
    %v455 = vadd.f32 0.0, %v454
    %v456 = vpop.f32.mrb[0].mxu0
    %457 = vdwg.mxu0
    %459 = vset.pattern.permute.xlu0 0
    %460 = vperm.xlu0 %459, %v376
    %v461 = vpop.permute.xlu0 %460
    %v462 = vlaneseq
    %v463 = vshrl.u32 %v462, 7
    %v464 = vsub.s32 %v250, %v463
    %v465 = vrot.slane %v461, %v464
    %v466 = vsel %vm385, %v465, 0
    %468 = vmatprep.subr.mxu0 0.0
    %469 = vmatpush1.msra.mxu0 %v30
    %470 = vmatprep.subr.mxu0 0.0
    %471 = vmatpush1.msra.mxu0 0.0
    %472 = vmatprep.subr.mxu0 0.0
    %473 = vmatpush1.msra.mxu0 0.0
    %474 = vmatprep.subr.mxu0 0.0
    %475 = vmatpush1.msra.mxu0 0.0
    %476 = vmatprep.subr.mxu0 0.0
    %477 = vmatpush1.msra.mxu0 0.0
    %478 = vmatprep.subr.mxu0 0.0
    %479 = vmatpush1.msra.mxu0 0.0
    %480 = vmatprep.subr.mxu0 0.0
    %481 = vmatpush1.msra.mxu0 0.0
    %482 = vmatprep.subr.mxu0 0.0
    %483 = vmatpush1.msra.mxu0 0.0
    %484 = vmatprep.subr.mxu0 0.0
    %485 = vmatpush1.msra.mxu0 0.0
    %486 = vmatprep.subr.mxu0 0.0
    %487 = vmatpush1.msra.mxu0 0.0
    %488 = vmatprep.subr.mxu0 0.0
    %489 = vmatpush1.msra.mxu0 0.0
    %490 = vmatprep.subr.mxu0 0.0
    %491 = vmatpush1.msra.mxu0 0.0
    %492 = vmatprep.subr.mxu0 0.0
    %493 = vmatpush1.msra.mxu0 0.0
    %494 = vmatprep.subr.mxu0 0.0
    %495 = vmatpush1.msra.mxu0 0.0
    %496 = vmatprep.subr.mxu0 0.0
    %497 = vmatpush1.msra.mxu0 0.0
    %498 = vmatprep.subr.mxu0 0.0
    %499 = vmatpush1.msra.mxu0 0.0
    %500 = vmatprep.subr.mxu0 0.0
    %501 = vmatpush1.msra.mxu0 0.0
    %502 = vmatprep.subr.mxu0 0.0
    %503 = vmatpush1.msra.mxu0 0.0
    %504 = vmatprep.subr.mxu0 0.0
    %505 = vmatpush1.msra.mxu0 0.0
    %506 = vmatprep.subr.mxu0 0.0
    %507 = vmatpush1.msra.mxu0 0.0
    %508 = vmatprep.subr.mxu0 0.0
    %509 = vmatpush1.msra.mxu0 0.0
    %510 = vmatprep.subr.mxu0 0.0
    %511 = vmatpush1.msra.mxu0 0.0
    %512 = vmatprep.subr.mxu0 0.0
    %513 = vmatpush1.msra.mxu0 0.0
    %514 = vmatprep.subr.mxu0 0.0
    %515 = vmatpush1.msra.mxu0 0.0
    %516 = vmatprep.subr.mxu0 0.0
    %517 = vmatpush1.msra.mxu0 0.0
    %518 = vmatprep.subr.mxu0 0.0
    %519 = vmatpush1.msra.mxu0 0.0
    %520 = vmatprep.subr.mxu0 0.0
    %521 = vmatpush1.msra.mxu0 0.0
    %522 = vmatprep.subr.mxu0 0.0
    %523 = vmatpush1.msra.mxu0 0.0
    %524 = vmatprep.subr.mxu0 0.0
    %525 = vmatpush1.msra.mxu0 0.0
    %526 = vmatprep.subr.mxu0 0.0
    %527 = vmatpush1.msra.mxu0 0.0
    %528 = vmatprep.subr.mxu0 0.0
    %529 = vmatpush1.msra.mxu0 0.0
    %530 = vmatprep.subr.mxu0 0.0
    %531 = vmatpush1.msra.mxu0 0.0
    %532 = vmatprep.mubr.f32.mxu0 0.0
    %533 = vmatmul.mubr.f32.gmra.mrb[0].mxu0 %v466
    %v534 = vpop.f32.mrb[0].mxu0
    %v535 = vadd.f32 0.0, %v534
    %v536 = vpop.f32.mrb[0].mxu0
    %537 = vdwg.mxu0
    %540 = vset.pattern.permute.xlu0 0
    %541 = vperm.xlu0 %540, %v316
    %v542 = vpop.permute.xlu0 %541
    %543 = vset.pattern.permute.xlu0 0
    %544 = vperm.xlu0 %543, %v318
    %v545 = vpop.permute.xlu0 %544
    %v546 = vlaneseq
    %v547 = vshrl.u32 %v546, 7
    %v548 = vsub.s32 %v250, %v547
    %v549 = vrot.slane %v542, %v548
    %v550 = vlaneseq
    %v551 = vshrl.u32 %v550, 7
    %v552 = vsub.s32 %v250, %v551
    %v553 = vrot.slane %v545, %v552
    %v554 = vsel %vm259, %v553, %v549
    %556 = vst.msk [vmem:[#allocation2] sm:$0x3] %vm262, %v554
    %v557 = vsel %vm259, %v465, %v384
    %559 = vst.msk [vmem:[#allocation4] sm:$0x3] %vm262, %v557
    %v562 = vrot.slane %v535, 7
    %v563 = vsel %vm259, %v562, %v455
    %vm565 = vcmask 254976
    %566 = vst.msk [vmem:[%s8] sm:$0x3] %vm565, %v563
    // Predicated region
    $region26: #{pairing_att_forward.1} parent=1 // pred_check
      _
    $region27: #{pairing_att_forward.1} parent=1 // pred_check_branch
      %568 = sbr.rel (0) target = $region29
    $region28: #{pairing_att_forward.1} parent=1 // pred_region
      %s570 = ssub.s32 32, 32
      %571 = vsyncadd [#allocation3], %s570
      %s573 = sshll.u32 [#allocation2], 4
      %s574 = int_to_ptr.vmem [resolvable:$true] %s573
      %576 = dma.vmem_to_hbm [thread:$0]  %s574, 32, %s6, [#allocation3]
    $region29: #{pairing_att_forward.1} parent=1 // pred_fallthru
      _
    // Predicated region
    $region30: #{pairing_att_forward.1} parent=1 // pred_check
      _
    $region31: #{pairing_att_forward.1} parent=1 // pred_check_branch
      %578 = sbr.rel (0) target = $region33
    $region32: #{pairing_att_forward.1} parent=1 // pred_region
      %s580 = ssub.s32 32, 32
      %581 = vsyncadd [#allocation5], %s580
      %s583 = sshll.u32 [#allocation4], 4
      %s584 = int_to_ptr.vmem [resolvable:$true] %s583
      %586 = dma.vmem_to_hbm [thread:$0]  %s584, 32, %s7, [#allocation5]
    $region33: #{pairing_att_forward.1} parent=1 // pred_fallthru
      _
    // Predicated region
    $region34: #{pairing_att_forward.1} parent=1 // pred_check
      _
    $region35: #{pairing_att_forward.1} parent=1 // pred_check_branch
      %588 = sbr.rel (0) target = $region37
    $region36: #{pairing_att_forward.1} parent=1 // pred_region
      _
    $region37: #{pairing_att_forward.1} parent=1 // pred_fallthru
      _
    // Predicated region
    $region38: #{pairing_att_forward.1} parent=1 // pred_check
      _
    $region39: #{pairing_att_forward.1} parent=1 // pred_check_branch
      %590 = sbr.rel (0) target = $region41
    $region40: #{pairing_att_forward.1} parent=1 // pred_region
      %591 = dma.done [#allocation3], 32
    $region41: #{pairing_att_forward.1} parent=1 // pred_fallthru
      _
    // Predicated region
    $region42: #{pairing_att_forward.1} parent=1 // pred_check
      _
    $region43: #{pairing_att_forward.1} parent=1 // pred_check_branch
      %593 = sbr.rel (0) target = $region45
    $region44: #{pairing_att_forward.1} parent=1 // pred_region
      %594 = dma.done [#allocation5], 32
    $region45: #{pairing_att_forward.1} parent=1 // pred_fallthru
      _
    // Predicated region
    $region46: #{pairing_att_forward.1} parent=1 // pred_check
      _
    $region47: #{pairing_att_forward.1} parent=1 // pred_check_branch
      %596 = sbr.rel (0) target = $region49
    $region48: #{pairing_att_forward.1} parent=1 // pred_region
      _
    $region49: #{pairing_att_forward.1} parent=1 // pred_fallthru
      _
    %597 = vsyncpa [#allocation3], 1
    %598 = vsyncpa [#allocation5], 1

</llo_original>
